<compile_context>
chip_gen: v6e
topology: v6e:2x2x1
jax: 0.10.0
libtpu: 0.0.40
codegen_flags: <defaults>
</compile_context>

<pallas_src>
import jax
import jax.numpy as jnp
import numpy as np
from jax import lax
from jax.experimental import pallas as pl
from jax.experimental.pallas import tpu as pltpu


# --------------------------------------------------------------------------
# Kernel
# --------------------------------------------------------------------------
def _cbam_kernel(x_ref, w1t_ref, w2t_ref, m_ref, out_ref):
    """One block of nb batch elements per grid step.

    x_ref   : (nb, C, HW)   input slab, lane-dense (HW on lanes)
    w1t_ref : (C, hidden)   center taps of channel-MLP conv1, transposed
    w2t_ref : (hidden, C)   center taps of channel-MLP conv2, transposed
    m_ref   : (2*HW, HW)    merged dense 7x7-conv operator [mean-rows; max-rows]
    out_ref : (nb, C, HW)
    """
    x = x_ref[...]                                              # (nb, C, HW) f32
    nb = x.shape[0]

    # ---------------- Channel attention ----------------
    avg_c = jnp.mean(x, axis=2)                                 # (nb, C)
    max_c = jnp.max(x, axis=2)                                  # (nb, C)
    pooled = jnp.concatenate([avg_c, max_c], axis=0)            # (2*nb, C)

    # Shared 2-layer MLP (bias-free) on both pooled branches, batched on MXU.
    h = jnp.maximum(
        jnp.dot(pooled, w1t_ref[...], preferred_element_type=jnp.float32), 0.0)
    att2 = jnp.dot(h, w2t_ref[...], preferred_element_type=jnp.float32)  # (2*nb, C)
    att = att2[:nb] + att2[nb:]                                 # avg-branch + max-branch

    gated = x * jax.nn.sigmoid(att)[:, :, None]                 # (nb, C, HW)

    # ---------------- Spatial attention ----------------
    avg_s = jnp.mean(gated, axis=1)                             # (nb, HW)
    max_s = jnp.max(gated, axis=1)                              # (nb, HW)
    s = jnp.concatenate([avg_s, max_s], axis=1)                 # (nb, 2*HW)

    conv = jnp.dot(s, m_ref[...], preferred_element_type=jnp.float32)  # (nb, HW)
    gate_s = jax.nn.sigmoid(conv)

    # single wide lane-dense store of the whole block
    out_ref[...] = (gated * gate_s[:, None, :]).astype(out_ref.dtype)


# --------------------------------------------------------------------------
# One-time parameter preparation (hoisted off the steady-state forward path)
# --------------------------------------------------------------------------
def _spatial_conv_operator(ws, H, W):
    """Fold Conv2d(2->1, k, pad=k//2, bias=False) over the (mean, max) maps into
    one dense matrix M of shape (2*H*W, H*W) such that
        conv(concat([mean, max]))_flat == concat([mean_flat, max_flat]) @ M
    (row-major flattened maps, SAME zero padding). Host-side numpy, run once."""
    ws = np.asarray(ws, np.float32)                     # (1, 2, k, k) OIHW
    k = ws.shape[-1]
    p = k // 2
    oi = np.arange(H)[:, None, None, None]              # output row
    oj = np.arange(W)[None, :, None, None]              # output col
    qi = np.arange(H)[None, None, :, None]              # input row
    qj = np.arange(W)[None, None, None, :]              # input col
    di = qi - oi + p
    dj = qj - oj + p
    valid = (di >= 0) & (di < k) & (dj >= 0) & (dj < k)
    taps = np.where(valid[None],
                    ws[0][:, np.clip(di, 0, k - 1), np.clip(dj, 0, k - 1)],
                    0.0)                                 # (2, H, W, H, W)
    m = np.transpose(taps, (0, 3, 4, 1, 2)).reshape(2 * H * W, H * W)
    return jnp.asarray(m, dtype=jnp.float32)


def make_cbam_params(w1_conv, w2_conv, ws_conv, H, W):
    """Precompute the kernel's constant operands from PyTorch-layout (OIHW) conv
    weights. Exact because all three convs are bias-free: the channel MLP acts
    on a 1x1 pooled map so only its center taps ever touch data."""
    ck = w1_conv.shape[-1]
    w1t = jnp.asarray(w1_conv)[:, :, ck // 2, ck // 2].T.astype(jnp.float32)  # (C, hidden)
    w2t = jnp.asarray(w2_conv)[:, :, ck // 2, ck // 2].T.astype(jnp.float32)  # (hidden, C)
    m = _spatial_conv_operator(np.asarray(ws_conv), H, W)                     # (2*HW, HW)
    return w1t, w2t, m


# --------------------------------------------------------------------------
# Forward wrapper
# --------------------------------------------------------------------------
def _choose_nb(N, C, HW, itemsize=4):
    """Fold batch elements per grid step: fill the 8-sublane vreg dim
    (nb*C >= 8) and keep per-step activation bytes modest; nb divides N."""
    cap = max(1, (1 << 20) // max(C * HW * itemsize, 1))   # ~1 MiB of x per step
    nb = min(N, cap)
    while N % nb:
        nb -= 1
    return max(nb, 1)
    # NOTE(v7x): when N is large, cap nb so the grid length stays >= 2 and the
    # "parallel" axis feeds both TensorCores; at toy N=2/C=4 filling sublanes wins.


def cbam_pallas(x, params, *, nb=None):
    """x: (N, C, H, W) f32; params = make_cbam_params(...)."""
    w1t, w2t, m = params
    N, C, H, W = x.shape
    HW = H * W
    hidden = w1t.shape[1]
    assert m.shape == (2 * HW, HW)
    if nb is None:
        nb = _choose_nb(N, C, HW)

    x_flat = x.reshape(N, C, HW).astype(jnp.float32)        # lane-dense view

    out_flat = pl.pallas_call(
        _cbam_kernel,
        out_shape=jax.ShapeDtypeStruct((N, C, HW), jnp.float32),
        grid=(N // nb,),
        in_specs=[
            pl.BlockSpec((nb, C, HW), lambda i: (i, 0, 0)),   # x block
            pl.BlockSpec((C, hidden), lambda i: (0, 0)),      # W1^T center taps
            pl.BlockSpec((hidden, C), lambda i: (0, 0)),      # W2^T center taps
            pl.BlockSpec((2 * HW, HW), lambda i: (0, 0)),     # merged spatial op
        ],
        out_specs=pl.BlockSpec((nb, C, HW), lambda i: (i, 0, 0)),
        compiler_params=pltpu.CompilerParams(
            dimension_semantics=("parallel",)),
    )(x_flat, w1t, w2t, m)

    return out_flat.reshape(N, C, H, W)


# --------------------------------------------------------------------------
# Pure-JAX reference (mirrors the PyTorch forward exactly)
# --------------------------------------------------------------------------
def cbam_ref(x, w1, w2, ws):
    dn = ('NCHW', 'OIHW', 'NCHW')
    prec = lax.Precision.HIGHEST
    avg = jnp.mean(x, axis=(2, 3), keepdims=True)
    mx = jnp.max(x, axis=(2, 3), keepdims=True)

    def mlp(t):
        h = lax.conv_general_dilated(t, w1, (1, 1), 'SAME',
                                     dimension_numbers=dn, precision=prec)
        h = jnp.maximum(h, 0.0)
        return lax.conv_general_dilated(h, w2, (1, 1), 'SAME',
                                        dimension_numbers=dn, precision=prec)

    xc = x * jax.nn.sigmoid(mlp(avg) + mlp(mx))
    s = jnp.concatenate([jnp.mean(xc, axis=1, keepdims=True),
                         jnp.max(xc, axis=1, keepdims=True)], axis=1)
    gate_s = jax.nn.sigmoid(
        lax.conv_general_dilated(s, ws, (1, 1), 'SAME',
                                 dimension_numbers=dn, precision=prec))
    return xc * gate_s


if __name__ == "__main__":
    key = jax.random.PRNGKey(0)
    kx, k1, k2, k3 = jax.random.split(key, 4)

    N, C, H, W = 2, 4, 16, 16
    reduction_ratio = 16
    spatial_kernel = 7
    # ChannelAttention._optimal_kernel_size(4) -> 7 ; hidden = max(1, 4 // 16) = 1
    ck = 3 if C % 3 == 0 else 5 if C % 5 == 0 else 7
    hidden = max(1, C // reduction_ratio)

    x = jax.random.normal(kx, (N, C, H, W), jnp.float32)
    w1 = jax.random.normal(k1, (hidden, C, ck, ck), jnp.float32) * 0.2
    w2 = jax.random.normal(k2, (C, hidden, ck, ck), jnp.float32) * 0.2
    ws = jax.random.normal(k3, (1, 2, spatial_kernel, spatial_kernel), jnp.float32) * 0.2

    params = make_cbam_params(w1, w2, ws, H, W)   # one-time setup, off hot path
    out = cbam_pallas(x, params)
    out = jax.block_until_ready(out)

    ref = cbam_ref(x, w1, w2, ws)
    err = float(jnp.max(jnp.abs(out - ref)))
    assert jnp.allclose(out, ref, atol=1e-3, rtol=1e-3), f"max abs err {err}"

    print("KERNEL_OK")
</pallas_src>

<mosaic_0001>
module attributes {stable_mosaic.version = 11 : i64} {
  func.func @_cbam_kernel(%arg0: i32, %arg1: memref<2x4x256xf32, #tpu.memory_space<vmem>>, %arg2: memref<4x1xf32, #tpu.memory_space<vmem>>, %arg3: memref<1x4xf32, #tpu.memory_space<vmem>>, %arg4: memref<512x256xf32, #tpu.memory_space<vmem>>, %arg5: memref<2x4x256xf32, #tpu.memory_space<vmem>>) attributes {dimension_semantics = [#tpu.dimension_semantics<parallel>], iteration_bounds = array<i64: 1>, scalar_prefetch = 0 : i64, scratch_operands = 0 : i64, tpu.core_type = #tpu.core_type<tc>, window_params = [{transform_indices = @transform_0, window_bounds = array<i64: 2, 4, 256>}, {pipeline_mode = #tpu.pipeline_mode<synchronous>, transform_indices = @transform_1, window_bounds = array<i64: 4, 1>}, {pipeline_mode = #tpu.pipeline_mode<synchronous>, transform_indices = @transform_2, window_bounds = array<i64: 1, 4>}, {pipeline_mode = #tpu.pipeline_mode<synchronous>, transform_indices = @transform_3, window_bounds = array<i64: 512, 256>}, {transform_indices = @transform_4, window_bounds = array<i64: 2, 4, 256>}]} {
    %c0 = arith.constant 0 : index
    %c0_0 = arith.constant 0 : index
    %c0_1 = arith.constant 0 : index
    %0 = vector.load %arg1[%c0, %c0_0, %c0_1] : memref<2x4x256xf32, #tpu.memory_space<vmem>>, vector<2x4x256xf32>
    %cst = arith.constant dense<0.000000e+00> : vector<2x4xf32>
    %1 = vector.multi_reduction <add>, %0, %cst [2] : vector<2x4x256xf32> to vector<2x4xf32>
    %cst_2 = arith.constant 2.560000e+02 : f32
    %2 = vector.broadcast %cst_2 : f32 to vector<2x4xf32>
    %3 = arith.divf %1, %2 : vector<2x4xf32>
    %cst_3 = arith.constant dense<0xFF800000> : vector<2x4xf32>
    %4 = vector.multi_reduction <maximumf>, %0, %cst_3 [2] : vector<2x4x256xf32> to vector<2x4xf32>
    %5 = tpu.concatenate %3, %4 in 0 : vector<2x4xf32>, vector<2x4xf32> -> vector<4x4xf32>
    %c0_4 = arith.constant 0 : index
    %c0_5 = arith.constant 0 : index
    %6 = vector.load %arg2[%c0_4, %c0_5] : memref<4x1xf32, #tpu.memory_space<vmem>>, vector<4x1xf32>
    %cst_6 = arith.constant dense<0.000000e+00> : vector<4x1xf32>
    %7 = tpu.matmul %5, %6, %cst_6 {dimension_numbers = #tpu.dot_dimension_numbers<[1], [0], [0], [1], [0, 0, 1, 1], [], []>} : vector<4x4xf32>, vector<4x1xf32>, vector<4x1xf32> -> vector<4x1xf32>
    %cst_7 = arith.constant 0.000000e+00 : f32
    %8 = vector.broadcast %cst_7 : f32 to vector<4x1xf32>
    %9 = arith.maximumf %7, %8 : vector<4x1xf32>
    %c0_8 = arith.constant 0 : index
    %c0_9 = arith.constant 0 : index
    %10 = vector.load %arg3[%c0_8, %c0_9] : memref<1x4xf32, #tpu.memory_space<vmem>>, vector<1x4xf32>
    %cst_10 = arith.constant dense<0.000000e+00> : vector<4x4xf32>
    %11 = tpu.matmul %9, %10, %cst_10 {dimension_numbers = #tpu.dot_dimension_numbers<[1], [0], [0], [1], [0, 0, 1, 1], [], []>} : vector<4x1xf32>, vector<1x4xf32>, vector<4x4xf32> -> vector<4x4xf32>
    %12 = vector.extract_strided_slice %11 {offsets = [0, 0], sizes = [2, 4], strides = [1, 1]} : vector<4x4xf32> to vector<2x4xf32>
    %13 = vector.extract_strided_slice %11 {offsets = [2, 0], sizes = [2, 4], strides = [1, 1]} : vector<4x4xf32> to vector<2x4xf32>
    %14 = arith.addf %12, %13 : vector<2x4xf32>
    %15 = arith.negf %14 : vector<2x4xf32>
    %16 = math.exp %15 : vector<2x4xf32>
    %cst_11 = arith.constant 1.000000e+00 : f32
    %17 = vector.broadcast %cst_11 : f32 to vector<2x4xf32>
    %18 = arith.addf %17, %16 : vector<2x4xf32>
    %19 = arith.divf %17, %18 : vector<2x4xf32>
    %20 = vector.shape_cast %19 : vector<2x4xf32> to vector<2x4x1xf32>
    %21 = vector.broadcast %20 : vector<2x4x1xf32> to vector<2x4x256xf32>
    %22 = arith.mulf %0, %21 : vector<2x4x256xf32>
    %cst_12 = arith.constant dense<0.000000e+00> : vector<2x256xf32>
    %23 = vector.multi_reduction <add>, %22, %cst_12 [1] : vector<2x4x256xf32> to vector<2x256xf32>
    %cst_13 = arith.constant 4.000000e+00 : f32
    %24 = vector.broadcast %cst_13 : f32 to vector<2x256xf32>
    %25 = arith.divf %23, %24 : vector<2x256xf32>
    %cst_14 = arith.constant dense<0xFF800000> : vector<2x256xf32>
    %26 = vector.multi_reduction <maximumf>, %22, %cst_14 [1] : vector<2x4x256xf32> to vector<2x256xf32>
    %27 = tpu.concatenate %25, %26 in 1 : vector<2x256xf32>, vector<2x256xf32> -> vector<2x512xf32>
    %c0_15 = arith.constant 0 : index
    %c0_16 = arith.constant 0 : index
    %28 = vector.load %arg4[%c0_15, %c0_16] : memref<512x256xf32, #tpu.memory_space<vmem>>, vector<512x256xf32>
    %cst_17 = arith.constant dense<0.000000e+00> : vector<2x256xf32>
    %29 = tpu.matmul %27, %28, %cst_17 {dimension_numbers = #tpu.dot_dimension_numbers<[1], [0], [0], [1], [0, 0, 1, 1], [], []>} : vector<2x512xf32>, vector<512x256xf32>, vector<2x256xf32> -> vector<2x256xf32>
    %30 = arith.negf %29 : vector<2x256xf32>
    %31 = math.exp %30 : vector<2x256xf32>
    %cst_18 = arith.constant 1.000000e+00 : f32
    %32 = vector.broadcast %cst_18 : f32 to vector<2x256xf32>
    %33 = arith.addf %32, %31 : vector<2x256xf32>
    %34 = arith.divf %32, %33 : vector<2x256xf32>
    %35 = vector.shape_cast %34 : vector<2x256xf32> to vector<2x1x256xf32>
    %36 = vector.broadcast %35 : vector<2x1x256xf32> to vector<2x4x256xf32>
    %37 = arith.mulf %22, %36 : vector<2x4x256xf32>
    %c0_19 = arith.constant 0 : index
    %c0_20 = arith.constant 0 : index
    %c0_21 = arith.constant 0 : index
    %38 = vector.load %arg5[%c0_19, %c0_20, %c0_21] : memref<2x4x256xf32, #tpu.memory_space<vmem>>, vector<2x4x256xf32>
    tpu.vector_store %arg5[%c0_19, %c0_20, %c0_21], %37 {strides = array<i32>} : memref<2x4x256xf32, #tpu.memory_space<vmem>>, vector<2x4x256xf32>,
    return
  }
  func.func @transform_0(%arg0: i32) -> (i32, i32, i32) {
    %c0_i32 = arith.constant 0 : i32
    %c0_i32_0 = arith.constant 0 : i32
    %c0_i32_1 = arith.constant 0 : i32
    return %arg0, %c0_i32, %c0_i32_0 : i32, i32, i32
  }
  func.func @transform_1(%arg0: i32) -> (i32, i32) {
    %c0_i32 = arith.constant 0 : i32
    %c0_i32_0 = arith.constant 0 : i32
    %c0_i32_1 = arith.constant 0 : i32
    return %c0_i32, %c0_i32_0 : i32, i32
  }
  func.func @transform_2(%arg0: i32) -> (i32, i32) {
    %c0_i32 = arith.constant 0 : i32
    %c0_i32_0 = arith.constant 0 : i32
    %c0_i32_1 = arith.constant 0 : i32
    return %c0_i32, %c0_i32_0 : i32, i32
  }
  func.func @transform_3(%arg0: i32) -> (i32, i32) {
    %c0_i32 = arith.constant 0 : i32
    %c0_i32_0 = arith.constant 0 : i32
    %c0_i32_1 = arith.constant 0 : i32
    return %c0_i32, %c0_i32_0 : i32, i32
  }
  func.func @transform_4(%arg0: i32) -> (i32, i32, i32) {
    %c0_i32 = arith.constant 0 : i32
    %c0_i32_0 = arith.constant 0 : i32
    %c0_i32_1 = arith.constant 0 : i32
    return %arg0, %c0_i32, %c0_i32_0 : i32, i32, i32
  }
}

</mosaic_0001>

<llo_original>
// kernel: tpu_custom_call.1
$region0: #{tpu_custom_call.1}
  #allocation0 [shape = 'u32[]', space=smem, size = 0x4, offset = 0x4, fixed_abs, tag = 'smem constant byte address 0x4 - core index']
  #allocation1 [shape = 'u32[144,128]{1,0:T(1,128)}', space=vmem, size = 0x12000, scoped, tag = 'internal scratch']
  %s0 = inlined_call_operand.hbm [shape: f32[2,4,256], index: 0, kind: input, shape index: {}]
  %s1 = inlined_call_operand.vmem [shape: f32[4,1], index: 1, kind: input, shape index: {}]
  %s2 = inlined_call_operand.vmem [shape: f32[1,4], index: 2, kind: input, shape index: {}]
  %s3 = inlined_call_operand.hbm [shape: f32[512,256], index: 3, kind: input, shape index: {}]
  %s4 = inlined_call_operand.hbm [shape: f32[2,4,256], index: 4, kind: output, shape index: {}]
  %s5 = sld [smem:[#allocation0]]
  $region34: #{tpu_custom_call.1} parent=0
    _
  %s7 = ssub.s32 1, %s5
  %s8 = scalar_select 0, %s7, %s5
  $region1: #{tpu_custom_call.1} parent=0
    #allocation2 [shape = 'u8[8192]{0}', space=vmem, size = 0x2000, scoped, tag = 'input window, operand 0, single buffered']
    #allocation3 [shape = 's32[1]{0}', space=sflag, size = 0x4, scoped, tag = 'scoped memory for tpu_custom_call.1']
    #allocation4 [shape = 's32[1]{0}', space=sflag, size = 0x4, scoped, tag = 'scoped memory for tpu_custom_call.1']
    #allocation5 [shape = 'u8[524288]{0}', space=vmem, size = 0x80000, scoped, tag = 'input window, operand 3, single buffered']
    #allocation6 [shape = 's32[1]{0}', space=sflag, size = 0x4, scoped, tag = 'scoped memory for tpu_custom_call.1']
    #allocation7 [shape = 'u8[8192]{0}', space=vmem, size = 0x2000, scoped, tag = 'output window, operand 0, single buffered']
    %9 = vsyncpa [#allocation3], 0
    %10 = vsyncpa [#allocation6], 0
    %11 = vsyncpa [#allocation4], 0
    // Predicated region
    $region2: #{tpu_custom_call.1} parent=1 // pred_check
      _
    $region3: #{tpu_custom_call.1} parent=1 // pred_check_branch
      %13 = sbr.rel (0) target = $region5
    $region4: #{tpu_custom_call.1} parent=1 // pred_region
      %s15 = ssub.s32 256, 256
      %16 = vsyncadd [#allocation3], %s15
      %s17 = sshll.u32 [#allocation2], 4
      %s18 = int_to_ptr.vmem [resolvable:$true] %s17
      %23 = dma.hbm_to_vmem [thread:$0]  %s0, 256, %s18, [#allocation3], 128, 128, 8
    $region5: #{tpu_custom_call.1} parent=1 // pred_fallthru
      _
    // Predicated region
    $region6: #{tpu_custom_call.1} parent=1 // pred_check
      _
    $region7: #{tpu_custom_call.1} parent=1 // pred_check_branch
      %25 = sbr.rel (0) target = $region9
    $region8: #{tpu_custom_call.1} parent=1 // pred_region
      _
    $region9: #{tpu_custom_call.1} parent=1 // pred_fallthru
      _
    // Predicated region
    $region10: #{tpu_custom_call.1} parent=1 // pred_check
      _
    $region11: #{tpu_custom_call.1} parent=1 // pred_check_branch
      %27 = sbr.rel (0) target = $region13
    $region12: #{tpu_custom_call.1} parent=1 // pred_region
      _
    $region13: #{tpu_custom_call.1} parent=1 // pred_fallthru
      _
    // Predicated region
    $region14: #{tpu_custom_call.1} parent=1 // pred_check
      _
    $region15: #{tpu_custom_call.1} parent=1 // pred_check_branch
      %29 = sbr.rel (0) target = $region17
    $region16: #{tpu_custom_call.1} parent=1 // pred_region
      %s31 = ssub.s32 16384, 16384
      %32 = vsyncadd [#allocation6], %s31
      %s33 = sshll.u32 [#allocation5], 4
      %s34 = int_to_ptr.vmem [resolvable:$true] %s33
      %39 = dma.hbm_to_vmem [thread:$0]  %s3, 16384, %s34, [#allocation6], 256, 256, 16
    $region17: #{tpu_custom_call.1} parent=1 // pred_fallthru
      _
    // Predicated region
    $region18: #{tpu_custom_call.1} parent=1 // pred_check
      _
    $region19: #{tpu_custom_call.1} parent=1 // pred_check_branch
      %41 = sbr.rel (0) target = $region21
    $region20: #{tpu_custom_call.1} parent=1 // pred_region
      %42 = dma.done [#allocation3], 256
    $region21: #{tpu_custom_call.1} parent=1 // pred_fallthru
      _
    // Predicated region
    $region22: #{tpu_custom_call.1} parent=1 // pred_check
      _
    $region23: #{tpu_custom_call.1} parent=1 // pred_check_branch
      %44 = sbr.rel (0) target = $region25
    $region24: #{tpu_custom_call.1} parent=1 // pred_region
      %45 = dma.done [#allocation6], 16384
    $region25: #{tpu_custom_call.1} parent=1 // pred_fallthru
      _
    %v46 = vld [vmem:[#allocation2] sm:$0xff]
    %v47 = vld [vmem:[#allocation2 + $0x8] sm:$0xff]
    %v50 = vcombine.high %v46, %v46
    %v51 = vcombine.high %v47, %v47
    %vm54 = vcmask 1043456
    %v55 = vsel %vm54, %v46, 0.0
    %v56 = vsel %vm54, %v50, 0.0
    %v57 = vadd.f32 %v55, %v56
    %58 = vadd.xlane.f32.xlu0 %v57
    %v59 = vpop.xlane.xlu0 %58
    %v60 = vsel %vm54, %v47, 0.0
    %v61 = vsel %vm54, %v51, 0.0
    %v62 = vadd.f32 %v60, %v61
    %63 = vadd.xlane.f32.xlu0 %v62
    %v64 = vpop.xlane.xlu0 %63
    %v65 = vrcp.pop 256.0
    %v66 = vmul.f32 %v59, %v65
    %v67 = vmul.f32 %v64, %v65
    %v68 = vsel %vm54, %v46, -inf
    %v69 = vsel %vm54, %v50, -inf
    %v70 = vmax.f32 %v68, %v69
    %71 = vmax.xlane.f32.xlu0 %v70
    %v72 = vpop.xlane.xlu0 %71
    %v73 = vsel %vm54, %v47, -inf
    %v74 = vsel %vm54, %v51, -inf
    %v75 = vmax.f32 %v73, %v74
    %76 = vmax.xlane.f32.xlu0 %v75
    %v77 = vpop.xlane.xlu0 %76
    %v80 = vlaneseq
    %v81 = vand.u32 %v80, 127
    %v82 = vlaneseq
    %v83 = vshrl.u32 %v82, 7
    %v84 = vsub.s32 %v81, %v83
    %v85 = vrot.slane %v66, %v84
    %v86 = vlaneseq
    %v87 = vshrl.u32 %v86, 7
    %v88 = vsub.s32 %v81, %v87
    %v89 = vrot.slane %v67, %v88
    %vm90 = vcmask 1041409
    %v91 = vsel %vm90, %v89, %v85
    %v95 = vlaneseq
    %v96 = vshrl.u32 %v95, 7
    %v97 = vsub.s32 %v81, %v96
    %v98 = vrot.slane %v72, %v97
    %v99 = vlaneseq
    %v100 = vshrl.u32 %v99, 7
    %v101 = vsub.s32 %v81, %v100
    %v102 = vrot.slane %v77, %v101
    %vm103 = vcmask 1043459
    %v104 = vsel %vm103, %v102, %v98
    %vm106 = vcmask 1041408
    %v107 = vsel %vm106, %v91, %v104
    %v108 = vld [vmem:[%s1] sm:$0xf]
    %vm109 = vcmask 31744
    %v111 = vsel %vm109, %v107, 0
    %v114 = vsel %vm54, %v108, 0
    %116 = vmatprep.subr.mxu0 0.0
    %117 = vmatpush1.msra.mxu0 0.0
    %118 = vmatprep.subr.mxu0 0.0
    %119 = vmatpush1.msra.mxu0 0.0
    %120 = vmatprep.subr.mxu0 0.0
    %121 = vmatpush1.msra.mxu0 0.0
    %122 = vmatprep.subr.mxu0 0.0
    %123 = vmatpush1.msra.mxu0 0.0
    %124 = vmatprep.subr.mxu0 0.0
    %125 = vmatpush1.msra.mxu0 0.0
    %126 = vmatprep.subr.mxu0 0.0
    %127 = vmatpush1.msra.mxu0 0.0
    %128 = vmatprep.subr.mxu0 0.0
    %129 = vmatpush1.msra.mxu0 0.0
    %130 = vmatprep.subr.mxu0 0.0
    %131 = vmatpush1.msra.mxu0 0.0
    %132 = vmatprep.subr.mxu0 0.0
    %133 = vmatpush1.msra.mxu0 0.0
    %134 = vmatprep.subr.mxu0 0.0
    %135 = vmatpush1.msra.mxu0 0.0
    %136 = vmatprep.subr.mxu0 0.0
    %137 = vmatpush1.msra.mxu0 0.0
    %138 = vmatprep.subr.mxu0 0.0
    %139 = vmatpush1.msra.mxu0 0.0
    %140 = vmatprep.subr.mxu0 0.0
    %141 = vmatpush1.msra.mxu0 0.0
    %142 = vmatprep.subr.mxu0 0.0
    %143 = vmatpush1.msra.mxu0 0.0
    %144 = vmatprep.subr.mxu0 0.0
    %145 = vmatpush1.msra.mxu0 0.0
    %146 = vmatprep.subr.mxu0 0.0
    %147 = vmatpush1.msra.mxu0 %v114
    %148 = vmatprep.subr.mxu0 0.0
    %149 = vmatpush2.msra.mxu0 0.0
    %150 = vmatprep.subr.mxu0 0.0
    %151 = vmatpush2.msra.mxu0 0.0
    %152 = vmatprep.subr.mxu0 0.0
    %153 = vmatpush2.msra.mxu0 0.0
    %154 = vmatprep.subr.mxu0 0.0
    %155 = vmatpush2.msra.mxu0 0.0
    %156 = vmatprep.subr.mxu0 0.0
    %157 = vmatpush2.msra.mxu0 0.0
    %158 = vmatprep.subr.mxu0 0.0
    %159 = vmatpush2.msra.mxu0 0.0
    %160 = vmatprep.subr.mxu0 0.0
    %161 = vmatpush2.msra.mxu0 0.0
    %162 = vmatprep.subr.mxu0 0.0
    %163 = vmatpush2.msra.mxu0 0.0
    %164 = vmatprep.subr.mxu0 0.0
    %165 = vmatpush2.msra.mxu0 0.0
    %166 = vmatprep.subr.mxu0 0.0
    %167 = vmatpush2.msra.mxu0 0.0
    %168 = vmatprep.subr.mxu0 0.0
    %169 = vmatpush2.msra.mxu0 0.0
    %170 = vmatprep.subr.mxu0 0.0
    %171 = vmatpush2.msra.mxu0 0.0
    %172 = vmatprep.subr.mxu0 0.0
    %173 = vmatpush2.msra.mxu0 0.0
    %174 = vmatprep.subr.mxu0 0.0
    %175 = vmatpush2.msra.mxu0 0.0
    %176 = vmatprep.subr.mxu0 0.0
    %177 = vmatpush2.msra.mxu0 0.0
    %178 = vmatprep.subr.mxu0 0.0
    %179 = vmatpush2.msra.mxu0 0.0
    %180 = vmatprep.mubr.f32.mxu0 0.0
    %181 = vmatmul.mubr.f32.gmra.mxu0 %v111
    %v182 = vpop.f32.mrf.mxu0
    %v183 = vadd.f32 0.0, %v182
    %v184 = vpop.f32.mrf.mxu0
    %185 = vdwg.mxu0
    %v186 = vmax.f32 %v183, 0.0
    %v187 = vld [vmem:[%s2] sm:$0x1]
    %vm188 = vcmask 7168
    %v190 = vsel %vm188, %v186, 0
    %vm192 = vcmask 1040384
    %v194 = vsel %vm192, %v187, 0
    %196 = vmatprep.subr.mxu0 0.0
    %197 = vmatpush1.msra.mxu0 0.0
    %198 = vmatprep.subr.mxu0 0.0
    %199 = vmatpush1.msra.mxu0 0.0
    %200 = vmatprep.subr.mxu0 0.0
    %201 = vmatpush1.msra.mxu0 0.0
    %202 = vmatprep.subr.mxu0 0.0
    %203 = vmatpush1.msra.mxu0 0.0
    %204 = vmatprep.subr.mxu0 0.0
    %205 = vmatpush1.msra.mxu0 0.0
    %206 = vmatprep.subr.mxu0 0.0
    %207 = vmatpush1.msra.mxu0 0.0
    %208 = vmatprep.subr.mxu0 0.0
    %209 = vmatpush1.msra.mxu0 0.0
    %210 = vmatprep.subr.mxu0 0.0
    %211 = vmatpush1.msra.mxu0 0.0
    %212 = vmatprep.subr.mxu0 0.0
    %213 = vmatpush1.msra.mxu0 0.0
    %214 = vmatprep.subr.mxu0 0.0
    %215 = vmatpush1.msra.mxu0 0.0
    %216 = vmatprep.subr.mxu0 0.0
    %217 = vmatpush1.msra.mxu0 0.0
    %218 = vmatprep.subr.mxu0 0.0
    %219 = vmatpush1.msra.mxu0 0.0
    %220 = vmatprep.subr.mxu0 0.0
    %221 = vmatpush1.msra.mxu0 0.0
    %222 = vmatprep.subr.mxu0 0.0
    %223 = vmatpush1.msra.mxu0 0.0
    %224 = vmatprep.subr.mxu0 0.0
    %225 = vmatpush1.msra.mxu0 0.0
    %226 = vmatprep.subr.mxu0 0.0
    %227 = vmatpush1.msra.mxu0 %v194
    %228 = vmatprep.subr.mxu0 0.0
    %229 = vmatpush2.msra.mxu0 0.0
    %230 = vmatprep.subr.mxu0 0.0
    %231 = vmatpush2.msra.mxu0 0.0
    %232 = vmatprep.subr.mxu0 0.0
    %233 = vmatpush2.msra.mxu0 0.0
    %234 = vmatprep.subr.mxu0 0.0
    %235 = vmatpush2.msra.mxu0 0.0
    %236 = vmatprep.subr.mxu0 0.0
    %237 = vmatpush2.msra.mxu0 0.0
    %238 = vmatprep.subr.mxu0 0.0
    %239 = vmatpush2.msra.mxu0 0.0
    %240 = vmatprep.subr.mxu0 0.0
    %241 = vmatpush2.msra.mxu0 0.0
    %242 = vmatprep.subr.mxu0 0.0
    %243 = vmatpush2.msra.mxu0 0.0
    %244 = vmatprep.subr.mxu0 0.0
    %245 = vmatpush2.msra.mxu0 0.0
    %246 = vmatprep.subr.mxu0 0.0
    %247 = vmatpush2.msra.mxu0 0.0
    %248 = vmatprep.subr.mxu0 0.0
    %249 = vmatpush2.msra.mxu0 0.0
    %250 = vmatprep.subr.mxu0 0.0
    %251 = vmatpush2.msra.mxu0 0.0
    %252 = vmatprep.subr.mxu0 0.0
    %253 = vmatpush2.msra.mxu0 0.0
    %254 = vmatprep.subr.mxu0 0.0
    %255 = vmatpush2.msra.mxu0 0.0
    %256 = vmatprep.subr.mxu0 0.0
    %257 = vmatpush2.msra.mxu0 0.0
    %258 = vmatprep.subr.mxu0 0.0
    %259 = vmatpush2.msra.mxu0 0.0
    %260 = vmatprep.mubr.f32.mxu0 0.0
    %261 = vmatmul.mubr.f32.gmra.mxu0 %v190
    %v262 = vpop.f32.mrf.mxu0
    %v263 = vadd.f32 0.0, %v262
    %v264 = vpop.f32.mrf.mxu0
    %265 = vdwg.mxu0
    %v267 = vrot.slane %v263, 2
    %v269 = vadd.f32 %v263, %v267
    %v270 = vxor.u32 %v269, 2147483648
    %v271 = vmul.f32 %v270, 1.442695
    %v272 = vpow.pop %v271
    %v273 = vadd.f32 %v272, 1.0
    %v274 = vrcp.pop %v273
    %v275 = vmul.f32 1.0, %v274
    %v276 = vlaneseq
    %v277 = vshrl.u32 %v276, 7
    %v278 = vsub.s32 0, %v277
    %v279 = vrot.slane %v275, %v278
    %281 = vbcast.lane.b32.xlu0 %v279, 256
    %v282 = vpop.permute.xlu0 %281
    %v283 = vlaneseq
    %v284 = vshrl.u32 %v283, 7
    %v285 = vsub.s32 1, %v284
    %v286 = vrot.slane %v275, %v285
    %288 = vbcast.lane.b32.xlu0 %v286, 256
    %v289 = vpop.permute.xlu0 %288
    %v293 = vunpack.c.l.s4 839922192
    %v294 = vunpack.c.0.s8 %v293
    %v295 = vlaneseq
    %v296 = vshrl.u32 %v295, 7
    %v297 = vsub.s32 %v294, %v296
    %v298 = vrot.slane %v282, %v297
    %v300 = vunpack.c.l.s4 839922192
    %v301 = vunpack.c.0.s8 %v300
    %v302 = vlaneseq
    %v303 = vshrl.u32 %v302, 7
    %v304 = vsub.s32 %v301, %v303
    %v305 = vrot.slane %v289, %v304
    %v308 = vmul.f32 %v46, %v298
    %v309 = vmul.f32 %v47, %v305
    %v312 = vcombine.high %v308, %v308
    %v313 = vcombine.high %v309, %v309
    %v316 = vsel %vm54, %v308, 0.0
    %v317 = vrot.slane %v316, 4
    %v318 = vadd.f32 %v316, %v317
    %v319 = vrot.slane %v318, 2
    %v320 = vadd.f32 %v318, %v319
    %v321 = vrot.slane %v320, 1
    %v322 = vadd.f32 %v320, %v321
    %v323 = vsel %vm54, %v312, 0.0
    %v324 = vrot.slane %v323, 4
    %v325 = vadd.f32 %v323, %v324
    %v326 = vrot.slane %v325, 2
    %v327 = vadd.f32 %v325, %v326
    %v328 = vrot.slane %v327, 1
    %v329 = vadd.f32 %v327, %v328
    %v330 = vsel %vm54, %v309, 0.0
    %v331 = vrot.slane %v330, 4
    %v332 = vadd.f32 %v330, %v331
    %v333 = vrot.slane %v332, 2
    %v334 = vadd.f32 %v332, %v333
    %v335 = vrot.slane %v334, 1
    %v336 = vadd.f32 %v334, %v335
    %v337 = vsel %vm54, %v313, 0.0
    %v338 = vrot.slane %v337, 4
    %v339 = vadd.f32 %v337, %v338
    %v340 = vrot.slane %v339, 2
    %v341 = vadd.f32 %v339, %v340
    %v342 = vrot.slane %v341, 1
    %v343 = vadd.f32 %v341, %v342
    %v344 = vrcp.pop 4.0
    %v345 = vmul.f32 %v322, %v344
    %v346 = vmul.f32 %v329, %v344
    %v347 = vmul.f32 %v336, %v344
    %v348 = vmul.f32 %v343, %v344
    %v349 = vsel %vm54, %v308, -inf
    %v350 = vrot.slane %v349, 4
    %v351 = vmax.f32 %v349, %v350
    %v352 = vrot.slane %v351, 2
    %v353 = vmax.f32 %v351, %v352
    %v354 = vrot.slane %v353, 1
    %v355 = vmax.f32 %v353, %v354
    %v356 = vsel %vm54, %v312, -inf
    %v357 = vrot.slane %v356, 4
    %v358 = vmax.f32 %v356, %v357
    %v359 = vrot.slane %v358, 2
    %v360 = vmax.f32 %v358, %v359
    %v361 = vrot.slane %v360, 1
    %v362 = vmax.f32 %v360, %v361
    %v363 = vsel %vm54, %v309, -inf
    %v364 = vrot.slane %v363, 4
    %v365 = vmax.f32 %v363, %v364
    %v366 = vrot.slane %v365, 2
    %v367 = vmax.f32 %v365, %v366
    %v368 = vrot.slane %v367, 1
    %v369 = vmax.f32 %v367, %v368
    %v370 = vsel %vm54, %v313, -inf
    %v371 = vrot.slane %v370, 4
    %v372 = vmax.f32 %v370, %v371
    %v373 = vrot.slane %v372, 2
    %v374 = vmax.f32 %v372, %v373
    %v375 = vrot.slane %v374, 1
    %v376 = vmax.f32 %v374, %v375
    %v381 = vsel %vm90, %v347, %v345
    %v382 = vsel %vm90, %v348, %v346
    %v389 = vsel %vm90, %v369, %v355
    %v390 = vsel %vm90, %v376, %v362
    %v393 = vld [vmem:[#allocation5] sm:$0xff]
    %v394 = vld [vmem:[#allocation5 + $0x8] sm:$0xff]
    %v395 = vld [vmem:[#allocation5 + $0x10] sm:$0xff]
    %v396 = vld [vmem:[#allocation5 + $0x18] sm:$0xff]
    %v397 = vld [vmem:[#allocation5 + $0x20] sm:$0xff]
    %v398 = vld [vmem:[#allocation5 + $0x28] sm:$0xff]
    %v399 = vld [vmem:[#allocation5 + $0x30] sm:$0xff]
    %v400 = vld [vmem:[#allocation5 + $0x38] sm:$0xff]
    %v401 = vld [vmem:[#allocation5 + $0x40] sm:$0xff]
    %v402 = vld [vmem:[#allocation5 + $0x48] sm:$0xff]
    %v403 = vld [vmem:[#allocation5 + $0x50] sm:$0xff]
    %v404 = vld [vmem:[#allocation5 + $0x58] sm:$0xff]
    %v405 = vld [vmem:[#allocation5 + $0x60] sm:$0xff]
    %v406 = vld [vmem:[#allocation5 + $0x68] sm:$0xff]
    %v407 = vld [vmem:[#allocation5 + $0x70] sm:$0xff]
    %v408 = vld [vmem:[#allocation5 + $0x78] sm:$0xff]
    %v409 = vld [vmem:[#allocation5 + $0x80] sm:$0xff]
    %v410 = vld [vmem:[#allocation5 + $0x88] sm:$0xff]
    %v411 = vld [vmem:[#allocation5 + $0x90] sm:$0xff]
    %v412 = vld [vmem:[#allocation5 + $0x98] sm:$0xff]
    %v413 = vld [vmem:[#allocation5 + $0xa0] sm:$0xff]
    %v414 = vld [vmem:[#allocation5 + $0xa8] sm:$0xff]
    %v415 = vld [vmem:[#allocation5 + $0xb0] sm:$0xff]
    %v416 = vld [vmem:[#allocation5 + $0xb8] sm:$0xff]
    %v417 = vld [vmem:[#allocation5 + $0xc0] sm:$0xff]
    %v418 = vld [vmem:[#allocation5 + $0xc8] sm:$0xff]
    %v419 = vld [vmem:[#allocation5 + $0xd0] sm:$0xff]
    %v420 = vld [vmem:[#allocation5 + $0xd8] sm:$0xff]
    %v421 = vld [vmem:[#allocation5 + $0xe0] sm:$0xff]
    %v422 = vld [vmem:[#allocation5 + $0xe8] sm:$0xff]
    %v423 = vld [vmem:[#allocation5 + $0xf0] sm:$0xff]
    %v424 = vld [vmem:[#allocation5 + $0xf8] sm:$0xff]
    %v425 = vld [vmem:[#allocation5 + $0x100] sm:$0xff]
    %v426 = vld [vmem:[#allocation5 + $0x108] sm:$0xff]
    %v427 = vld [vmem:[#allocation5 + $0x110] sm:$0xff]
    %v428 = vld [vmem:[#allocation5 + $0x118] sm:$0xff]
    %v429 = vld [vmem:[#allocation5 + $0x120] sm:$0xff]
    %v430 = vld [vmem:[#allocation5 + $0x128] sm:$0xff]
    %v431 = vld [vmem:[#allocation5 + $0x130] sm:$0xff]
    %v432 = vld [vmem:[#allocation5 + $0x138] sm:$0xff]
    %v433 = vld [vmem:[#allocation5 + $0x140] sm:$0xff]
    %v434 = vld [vmem:[#allocation5 + $0x148] sm:$0xff]
    %v435 = vld [vmem:[#allocation5 + $0x150] sm:$0xff]
    %v436 = vld [vmem:[#allocation5 + $0x158] sm:$0xff]
    %v437 = vld [vmem:[#allocation5 + $0x160] sm:$0xff]
    %v438 = vld [vmem:[#allocation5 + $0x168] sm:$0xff]
    %v439 = vld [vmem:[#allocation5 + $0x170] sm:$0xff]
    %v440 = vld [vmem:[#allocation5 + $0x178] sm:$0xff]
    %v441 = vld [vmem:[#allocation5 + $0x180] sm:$0xff]
    %v442 = vld [vmem:[#allocation5 + $0x188] sm:$0xff]
    %v443 = vld [vmem:[#allocation5 + $0x190] sm:$0xff]
    %v444 = vld [vmem:[#allocation5 + $0x198] sm:$0xff]
    %v445 = vld [vmem:[#allocation5 + $0x1a0] sm:$0xff]
    %v446 = vld [vmem:[#allocation5 + $0x1a8] sm:$0xff]
    %v447 = vld [vmem:[#allocation5 + $0x1b0] sm:$0xff]
    %v448 = vld [vmem:[#allocation5 + $0x1b8] sm:$0xff]
    %v449 = vld [vmem:[#allocation5 + $0x1c0] sm:$0xff]
    %v450 = vld [vmem:[#allocation5 + $0x1c8] sm:$0xff]
    %v451 = vld [vmem:[#allocation5 + $0x1d0] sm:$0xff]
    %v452 = vld [vmem:[#allocation5 + $0x1d8] sm:$0xff]
    %v453 = vld [vmem:[#allocation5 + $0x1e0] sm:$0xff]
    %v454 = vld [vmem:[#allocation5 + $0x1e8] sm:$0xff]
    %v455 = vld [vmem:[#allocation5 + $0x1f0] sm:$0xff]
    %v456 = vld [vmem:[#allocation5 + $0x1f8] sm:$0xff]
    %v457 = vld [vmem:[#allocation5 + $0x200] sm:$0xff]
    %v458 = vld [vmem:[#allocation5 + $0x208] sm:$0xff]
    %v459 = vld [vmem:[#allocation5 + $0x210] sm:$0xff]
    %v460 = vld [vmem:[#allocation5 + $0x218] sm:$0xff]
    %v461 = vld [vmem:[#allocation5 + $0x220] sm:$0xff]
    %v462 = vld [vmem:[#allocation5 + $0x228] sm:$0xff]
    %v463 = vld [vmem:[#allocation5 + $0x230] sm:$0xff]
    %v464 = vld [vmem:[#allocation5 + $0x238] sm:$0xff]
    %v465 = vld [vmem:[#allocation5 + $0x240] sm:$0xff]
    %v466 = vld [vmem:[#allocation5 + $0x248] sm:$0xff]
    %v467 = vld [vmem:[#allocation5 + $0x250] sm:$0xff]
    %v468 = vld [vmem:[#allocation5 + $0x258] sm:$0xff]
    %v469 = vld [vmem:[#allocation5 + $0x260] sm:$0xff]
    %v470 = vld [vmem:[#allocation5 + $0x268] sm:$0xff]
    %v471 = vld [vmem:[#allocation5 + $0x270] sm:$0xff]
    %v472 = vld [vmem:[#allocation5 + $0x278] sm:$0xff]
    %v473 = vld [vmem:[#allocation5 + $0x280] sm:$0xff]
    %v474 = vld [vmem:[#allocation5 + $0x288] sm:$0xff]
    %v475 = vld [vmem:[#allocation5 + $0x290] sm:$0xff]
    %v476 = vld [vmem:[#allocation5 + $0x298] sm:$0xff]
    %v477 = vld [vmem:[#allocation5 + $0x2a0] sm:$0xff]
    %v478 = vld [vmem:[#allocation5 + $0x2a8] sm:$0xff]
    %v479 = vld [vmem:[#allocation5 + $0x2b0] sm:$0xff]
    %v480 = vld [vmem:[#allocation5 + $0x2b8] sm:$0xff]
    %v481 = vld [vmem:[#allocation5 + $0x2c0] sm:$0xff]
    %v482 = vld [vmem:[#allocation5 + $0x2c8] sm:$0xff]
    %v483 = vld [vmem:[#allocation5 + $0x2d0] sm:$0xff]
    %v484 = vld [vmem:[#allocation5 + $0x2d8] sm:$0xff]
    %v485 = vld [vmem:[#allocation5 + $0x2e0] sm:$0xff]
    %v486 = vld [vmem:[#allocation5 + $0x2e8] sm:$0xff]
    %v487 = vld [vmem:[#allocation5 + $0x2f0] sm:$0xff]
    %v488 = vld [vmem:[#allocation5 + $0x2f8] sm:$0xff]
    %v489 = vld [vmem:[#allocation5 + $0x300] sm:$0xff]
    %v490 = vld [vmem:[#allocation5 + $0x308] sm:$0xff]
    %v491 = vld [vmem:[#allocation5 + $0x310] sm:$0xff]
    %v492 = vld [vmem:[#allocation5 + $0x318] sm:$0xff]
    %v493 = vld [vmem:[#allocation5 + $0x320] sm:$0xff]
    %v494 = vld [vmem:[#allocation5 + $0x328] sm:$0xff]
    %v495 = vld [vmem:[#allocation5 + $0x330] sm:$0xff]
    %v496 = vld [vmem:[#allocation5 + $0x338] sm:$0xff]
    %v497 = vld [vmem:[#allocation5 + $0x340] sm:$0xff]
    %v498 = vld [vmem:[#allocation5 + $0x348] sm:$0xff]
    %v499 = vld [vmem:[#allocation5 + $0x350] sm:$0xff]
    %v500 = vld [vmem:[#allocation5 + $0x358] sm:$0xff]
    %v501 = vld [vmem:[#allocation5 + $0x360] sm:$0xff]
    %v502 = vld [vmem:[#allocation5 + $0x368] sm:$0xff]
    %v503 = vld [vmem:[#allocation5 + $0x370] sm:$0xff]
    %v504 = vld [vmem:[#allocation5 + $0x378] sm:$0xff]
    %v505 = vld [vmem:[#allocation5 + $0x380] sm:$0xff]
    %v506 = vld [vmem:[#allocation5 + $0x388] sm:$0xff]
    %v507 = vld [vmem:[#allocation5 + $0x390] sm:$0xff]
    %v508 = vld [vmem:[#allocation5 + $0x398] sm:$0xff]
    %v509 = vld [vmem:[#allocation5 + $0x3a0] sm:$0xff]
    %v510 = vld [vmem:[#allocation5 + $0x3a8] sm:$0xff]
    %v511 = vld [vmem:[#allocation5 + $0x3b0] sm:$0xff]
    %v512 = vld [vmem:[#allocation5 + $0x3b8] sm:$0xff]
    %v513 = vld [vmem:[#allocation5 + $0x3c0] sm:$0xff]
    %v514 = vld [vmem:[#allocation5 + $0x3c8] sm:$0xff]
    %v515 = vld [vmem:[#allocation5 + $0x3d0] sm:$0xff]
    %v516 = vld [vmem:[#allocation5 + $0x3d8] sm:$0xff]
    %v517 = vld [vmem:[#allocation5 + $0x3e0] sm:$0xff]
    %v518 = vld [vmem:[#allocation5 + $0x3e8] sm:$0xff]
    %v519 = vld [vmem:[#allocation5 + $0x3f0] sm:$0xff]
    %v520 = vld [vmem:[#allocation5 + $0x3f8] sm:$0xff]
    %521 = vmatprep.subr.mxu0 %v424
    %522 = vmatpush1.msra.mxu0 %v423
    %523 = vmatprep.subr.mxu0 %v422
    %524 = vmatpush1.msra.mxu0 %v421
    %525 = vmatprep.subr.mxu0 %v420
    %526 = vmatpush1.msra.mxu0 %v419
    %527 = vmatprep.subr.mxu0 %v418
    %528 = vmatpush1.msra.mxu0 %v417
    %529 = vmatprep.subr.mxu0 %v416
    %530 = vmatpush1.msra.mxu0 %v415
    %531 = vmatprep.subr.mxu0 %v414
    %532 = vmatpush1.msra.mxu0 %v413
    %533 = vmatprep.subr.mxu0 %v412
    %534 = vmatpush1.msra.mxu0 %v411
    %535 = vmatprep.subr.mxu0 %v410
    %536 = vmatpush1.msra.mxu0 %v409
    %537 = vmatprep.subr.mxu0 %v408
    %538 = vmatpush1.msra.mxu0 %v407
    %539 = vmatprep.subr.mxu0 %v406
    %540 = vmatpush1.msra.mxu0 %v405
    %541 = vmatprep.subr.mxu0 %v404
    %542 = vmatpush1.msra.mxu0 %v403
    %543 = vmatprep.subr.mxu0 %v402
    %544 = vmatpush1.msra.mxu0 %v401
    %545 = vmatprep.subr.mxu0 %v400
    %546 = vmatpush1.msra.mxu0 %v399
    %547 = vmatprep.subr.mxu0 %v398
    %548 = vmatpush1.msra.mxu0 %v397
    %549 = vmatprep.subr.mxu0 %v396
    %550 = vmatpush1.msra.mxu0 %v395
    %551 = vmatprep.subr.mxu0 %v394
    %552 = vmatpush1.msra.mxu0 %v393
    %553 = vmatprep.subr.mxu0 %v456
    %554 = vmatpush2.msra.mxu0 %v455
    %555 = vmatprep.subr.mxu0 %v454
    %556 = vmatpush2.msra.mxu0 %v453
    %557 = vmatprep.subr.mxu0 %v452
    %558 = vmatpush2.msra.mxu0 %v451
    %559 = vmatprep.subr.mxu0 %v450
    %560 = vmatpush2.msra.mxu0 %v449
    %561 = vmatprep.subr.mxu0 %v448
    %562 = vmatpush2.msra.mxu0 %v447
    %563 = vmatprep.subr.mxu0 %v446
    %564 = vmatpush2.msra.mxu0 %v445
    %565 = vmatprep.subr.mxu0 %v444
    %566 = vmatpush2.msra.mxu0 %v443
    %567 = vmatprep.subr.mxu0 %v442
    %568 = vmatpush2.msra.mxu0 %v441
    %569 = vmatprep.subr.mxu0 %v440
    %570 = vmatpush2.msra.mxu0 %v439
    %571 = vmatprep.subr.mxu0 %v438
    %572 = vmatpush2.msra.mxu0 %v437
    %573 = vmatprep.subr.mxu0 %v436
    %574 = vmatpush2.msra.mxu0 %v435
    %575 = vmatprep.subr.mxu0 %v434
    %576 = vmatpush2.msra.mxu0 %v433
    %577 = vmatprep.subr.mxu0 %v432
    %578 = vmatpush2.msra.mxu0 %v431
    %579 = vmatprep.subr.mxu0 %v430
    %580 = vmatpush2.msra.mxu0 %v429
    %581 = vmatprep.subr.mxu0 %v428
    %582 = vmatpush2.msra.mxu0 %v427
    %583 = vmatprep.subr.mxu0 %v426
    %584 = vmatpush2.msra.mxu0 %v425
    %585 = vmatprep.mubr.f32.mxu0 %v382
    %586 = vmatmul.mubr.f32.gmra.mxu0 %v381
    %v587 = vpop.f32.mrf.mxu0
    %v588 = vadd.f32 0.0, %v587
    %v589 = vpop.f32.mrf.mxu0
    %v590 = vadd.f32 0.0, %v589
    %591 = vdwg.mxu0
    %592 = vmatprep.subr.mxu0 %v488
    %593 = vmatpush1.msra.mxu0 %v487
    %594 = vmatprep.subr.mxu0 %v486
    %595 = vmatpush1.msra.mxu0 %v485
    %596 = vmatprep.subr.mxu0 %v484
    %597 = vmatpush1.msra.mxu0 %v483
    %598 = vmatprep.subr.mxu0 %v482
    %599 = vmatpush1.msra.mxu0 %v481
    %600 = vmatprep.subr.mxu0 %v480
    %601 = vmatpush1.msra.mxu0 %v479
    %602 = vmatprep.subr.mxu0 %v478
    %603 = vmatpush1.msra.mxu0 %v477
    %604 = vmatprep.subr.mxu0 %v476
    %605 = vmatpush1.msra.mxu0 %v475
    %606 = vmatprep.subr.mxu0 %v474
    %607 = vmatpush1.msra.mxu0 %v473
    %608 = vmatprep.subr.mxu0 %v472
    %609 = vmatpush1.msra.mxu0 %v471
    %610 = vmatprep.subr.mxu0 %v470
    %611 = vmatpush1.msra.mxu0 %v469
    %612 = vmatprep.subr.mxu0 %v468
    %613 = vmatpush1.msra.mxu0 %v467
    %614 = vmatprep.subr.mxu0 %v466
    %615 = vmatpush1.msra.mxu0 %v465
    %616 = vmatprep.subr.mxu0 %v464
    %617 = vmatpush1.msra.mxu0 %v463
    %618 = vmatprep.subr.mxu0 %v462
    %619 = vmatpush1.msra.mxu0 %v461
    %620 = vmatprep.subr.mxu0 %v460
    %621 = vmatpush1.msra.mxu0 %v459
    %622 = vmatprep.subr.mxu0 %v458
    %623 = vmatpush1.msra.mxu0 %v457
    %624 = vmatprep.subr.mxu0 %v520
    %625 = vmatpush2.msra.mxu0 %v519
    %626 = vmatprep.subr.mxu0 %v518
    %627 = vmatpush2.msra.mxu0 %v517
    %628 = vmatprep.subr.mxu0 %v516
    %629 = vmatpush2.msra.mxu0 %v515
    %630 = vmatprep.subr.mxu0 %v514
    %631 = vmatpush2.msra.mxu0 %v513
    %632 = vmatprep.subr.mxu0 %v512
    %633 = vmatpush2.msra.mxu0 %v511
    %634 = vmatprep.subr.mxu0 %v510
    %635 = vmatpush2.msra.mxu0 %v509
    %636 = vmatprep.subr.mxu0 %v508
    %637 = vmatpush2.msra.mxu0 %v507
    %638 = vmatprep.subr.mxu0 %v506
    %639 = vmatpush2.msra.mxu0 %v505
    %640 = vmatprep.subr.mxu0 %v504
    %641 = vmatpush2.msra.mxu0 %v503
    %642 = vmatprep.subr.mxu0 %v502
    %643 = vmatpush2.msra.mxu0 %v501
    %644 = vmatprep.subr.mxu0 %v500
    %645 = vmatpush2.msra.mxu0 %v499
    %646 = vmatprep.subr.mxu0 %v498
    %647 = vmatpush2.msra.mxu0 %v497
    %648 = vmatprep.subr.mxu0 %v496
    %649 = vmatpush2.msra.mxu0 %v495
    %650 = vmatprep.subr.mxu0 %v494
    %651 = vmatpush2.msra.mxu0 %v493
    %652 = vmatprep.subr.mxu0 %v492
    %653 = vmatpush2.msra.mxu0 %v491
    %654 = vmatprep.subr.mxu0 %v490
    %655 = vmatpush2.msra.mxu0 %v489
    %656 = vmatprep.mubr.f32.mxu0 %v390
    %657 = vmatmul.mubr.f32.gmra.mxu0 %v389
    %v658 = vpop.f32.mrf.mxu0
    %v659 = vadd.f32 %v588, %v658
    %v660 = vpop.f32.mrf.mxu0
    %v661 = vadd.f32 %v590, %v660
    %662 = vdwg.mxu0
    %v663 = vxor.u32 %v659, 2147483648
    %v664 = vxor.u32 %v661, 2147483648
    %v665 = vmul.f32 %v663, 1.442695
    %v666 = vpow.pop %v665
    %v667 = vmul.f32 %v664, 1.442695
    %v668 = vpow.pop %v667
    %v669 = vadd.f32 %v666, 1.0
    %v670 = vadd.f32 %v668, 1.0
    %v671 = vrcp.pop %v669
    %v672 = vmul.f32 1.0, %v671
    %v673 = vrcp.pop %v670
    %v674 = vmul.f32 1.0, %v673
    %v677 = vcombine.low %v672, %v674
    %v679 = vunpack.c.l.s4 1966171168
    %v680 = vunpack.c.0.s8 %v679
    %v681 = vlaneseq
    %v682 = vshrl.u32 %v681, 7
    %v683 = vsub.s32 %v680, %v682
    %v684 = vrot.slane %v677, %v683
    %v685 = vcombine.high %v684, %v684
    %v687 = vunpack.c.l.s4 1966171168
    %v688 = vunpack.c.0.s8 %v687
    %v689 = vlaneseq
    %v690 = vshrl.u32 %v689, 7
    %v691 = vsub.s32 %v688, %v690
    %v692 = vrot.slane %v684, %v691
    %v694 = vunpack.c.l.s4 1966171168
    %v695 = vunpack.c.0.s8 %v694
    %v696 = vlaneseq
    %v697 = vshrl.u32 %v696, 7
    %v698 = vsub.s32 %v695, %v697
    %v699 = vrot.slane %v685, %v698
    %v700 = vlaneseq
    %v701 = vshrl.u32 %v700, 7
    %v702 = vsub.s32 0, %v701
    %v703 = vrot.slane %v692, %v702
    %v704 = vlaneseq
    %v705 = vshrl.u32 %v704, 7
    %v706 = vsub.s32 1, %v705
    %v707 = vrot.slane %v692, %v706
    %v708 = vlaneseq
    %v709 = vshrl.u32 %v708, 7
    %v710 = vsub.s32 0, %v709
    %v711 = vrot.slane %v699, %v710
    %v712 = vlaneseq
    %v713 = vshrl.u32 %v712, 7
    %v714 = vsub.s32 1, %v713
    %v715 = vrot.slane %v699, %v714
    %v716 = vcombine.low %v703, %v707
    %v717 = vcombine.low %v711, %v715
    %v720 = vmul.f32 %v308, %v716
    %v721 = vmul.f32 %v309, %v717
    %722 = vst [vmem:[#allocation7] sm:$0xff] %v720
    %723 = vst [vmem:[#allocation7 + $0x8] sm:$0xff] %v721
    // Predicated region
    $region26: #{tpu_custom_call.1} parent=1 // pred_check
      _
    $region27: #{tpu_custom_call.1} parent=1 // pred_check_branch
      %725 = sbr.rel (0) target = $region29
    $region28: #{tpu_custom_call.1} parent=1 // pred_region
      %s727 = ssub.s32 256, 256
      %728 = vsyncadd [#allocation4], %s727
      %s729 = sshll.u32 [#allocation7], 4
      %s730 = int_to_ptr.vmem [resolvable:$true] %s729
      %735 = dma.vmem_to_hbm [thread:$0]  %s730, 256, %s4, [#allocation4], 128, 128, 8
    $region29: #{tpu_custom_call.1} parent=1 // pred_fallthru
      _
    // Predicated region
    $region30: #{tpu_custom_call.1} parent=1 // pred_check
      _
    $region31: #{tpu_custom_call.1} parent=1 // pred_check_branch
      %737 = sbr.rel (0) target = $region33
    $region32: #{tpu_custom_call.1} parent=1 // pred_region
      %738 = dma.done [#allocation4], 256
    $region33: #{tpu_custom_call.1} parent=1 // pred_fallthru
      _
    %739 = vsyncpa [#allocation3], 1
    %740 = vsyncpa [#allocation6], 1
    %741 = vsyncpa [#allocation4], 1

</llo_original>
